<compile_context>
chip_gen: v5e
topology: v5e:2x2
jax: 0.10.0
libtpu: 0.0.40
codegen_flags: <defaults>
</compile_context>

<pallas_src>
import jax
import jax.numpy as jnp
from jax import lax
from jax.experimental import pallas as pl
from jax.experimental.pallas import tpu as pltpu


# ---------------------------------------------------------------------------
# Kernel 1: DoRA weight construction, tiled over in_dim column blocks.
# ---------------------------------------------------------------------------
def _dora_weight_kernel(alpha_ref, w_ref, a_ref, b_ref, m_ref, new_w_ref):
    alpha = alpha_ref[0, 0]
    # lora.T column-slice directly: result[o, c] = sum_r B[r, o] * A[c, r]
    lora_t = lax.dot_general(
        b_ref[...].astype(jnp.float32), a_ref[...].astype(jnp.float32),
        dimension_numbers=(((0,), (1,)), ((), ())),
        preferred_element_type=jnp.float32)                   # (out_dim, tc)
    numerator = w_ref[...].astype(jnp.float32) + alpha * lora_t
    out_dim = numerator.shape[0]
    # Column-wise (over out_dim) sum of squares via an MXU ones-row matmul
    # instead of an XLU sublane reduction.
    sq_sum = jnp.dot(jnp.ones((1, out_dim), jnp.float32),
                     numerator * numerator,
                     preferred_element_type=jnp.float32)      # (1, tc)
    inv_norm = lax.rsqrt(sq_sum)                              # EUP, ~free slot
    scale = m_ref[...].astype(jnp.float32) * inv_norm         # (1, tc)
    new_w_ref[...] = (numerator * scale).astype(new_w_ref.dtype)


def prepare_dora_weight(weight, A, B, m, alpha, out_dtype, *, tc=512):
    """weight: (out_dim, in_dim); A: (in_dim, rank); B: (rank, out_dim);
    m: (1, in_dim) (or (in_dim,)).  Returns new_w: (out_dim, in_dim)."""
    out_dim, in_dim = weight.shape
    rank = A.shape[1]
    # Column-tile size must be a multiple of 128 or the full in_dim.
    if in_dim % 128 == 0:
        tc = min(tc, in_dim)
    else:
        tc = in_dim
    grid = (pl.cdiv(in_dim, tc),)

    alpha_arr = jnp.full((1, 1), alpha, dtype=jnp.float32)
    m2 = m.reshape(1, in_dim)

    return pl.pallas_call(
        _dora_weight_kernel,
        out_shape=jax.ShapeDtypeStruct((out_dim, in_dim), out_dtype),
        grid=grid,
        in_specs=[
            pl.BlockSpec(memory_space=pltpu.MemorySpace.SMEM),  # alpha scalar
            pl.BlockSpec((out_dim, tc), lambda i: (0, i)),      # W column block
            pl.BlockSpec((tc, rank), lambda i: (i, 0)),         # A row block
            pl.BlockSpec((rank, out_dim), lambda i: (0, 0)),    # B (resident)
            pl.BlockSpec((1, tc), lambda i: (0, i)),            # m column block
        ],
        out_specs=pl.BlockSpec((out_dim, tc), lambda i: (0, i)),
        compiler_params=pltpu.CompilerParams(
            dimension_semantics=("parallel",)),
        cost_estimate=pl.CostEstimate(
            flops=2 * rank * in_dim * out_dim + 4 * in_dim * out_dim,
            transcendentals=in_dim,
            bytes_accessed=2 * out_dim * in_dim * 4,
        ),
    )(alpha_arr, weight, A, B, m2)


# ---------------------------------------------------------------------------
# Kernel 2: y = x @ new_w.T + bias (pipelined, megacore-parallel grid).
# ---------------------------------------------------------------------------
def _matmul_bias_kernel(x_ref, w_ref, bias_ref, o_ref):
    y = lax.dot_general(
        x_ref[...], w_ref[...],
        dimension_numbers=(((1,), (1,)), ((), ())),            # contract in_dim
        preferred_element_type=jnp.float32)                    # (tm, tn)
    o_ref[...] = (y + bias_ref[...].astype(jnp.float32)).astype(o_ref.dtype)


def dora_linear(x2d, new_w, bias, *, tm=256, tn=None):
    """x2d: (N, in_dim); new_w: (out_dim, in_dim); returns (N, out_dim)."""
    N, in_dim = x2d.shape
    out_dim = new_w.shape[0]
    itemsize = jnp.dtype(x2d.dtype).itemsize

    tm = min(tm, N)
    if tn is None:
        # Keep the whole weight VMEM-resident when it comfortably fits;
        # otherwise tile out_dim in lane-dense multiples of 128.
        if out_dim <= 512 or out_dim * in_dim * itemsize <= 16 * 1024 * 1024:
            tn = out_dim
        else:
            tn = 512
    # TODO(synk): for in_dim too large for a (tn, in_dim) weight tile in VMEM,
    # add a K (in_dim) reduction grid axis with a float32 VMEM accumulator.

    grid = (pl.cdiv(N, tm), pl.cdiv(out_dim, tn))
    bias2 = bias.reshape(1, out_dim)

    cost = pl.CostEstimate(
        flops=2 * N * in_dim * out_dim,
        transcendentals=0,
        bytes_accessed=(N * in_dim + out_dim * in_dim + N * out_dim) * itemsize,
    )

    return pl.pallas_call(
        _matmul_bias_kernel,
        out_shape=jax.ShapeDtypeStruct((N, out_dim), x2d.dtype),
        grid=grid,
        in_specs=[
            pl.BlockSpec((tm, in_dim), lambda i, j: (i, 0)),    # x tile
            pl.BlockSpec((tn, in_dim), lambda i, j: (j, 0)),    # weight tile
            pl.BlockSpec((1, tn), lambda i, j: (0, j)),         # bias tile
        ],
        out_specs=pl.BlockSpec((tm, tn), lambda i, j: (i, j)),
        compiler_params=pltpu.CompilerParams(
            dimension_semantics=("parallel", "parallel")),
        cost_estimate=cost,
    )(x2d, new_w, bias2)


def low_rank_layer_forward(x, weight, bias, A, B, m, alpha, *, tm=256):
    """x: (batch, seq, in_dim) -> (batch, seq, out_dim). use_dora=True path."""
    # TODO(synk): use_dora=False path (skip the norm/m rescale) not implemented.
    batch, seq, in_dim = x.shape
    out_dim = weight.shape[0]
    new_w = prepare_dora_weight(weight, A, B, m, alpha, x.dtype)
    x2d = x.reshape(batch * seq, in_dim)
    y2d = dora_linear(x2d, new_w, bias, tm=tm)
    return y2d.reshape(batch, seq, out_dim)


if __name__ == "__main__":
    # Small, deterministic shapes consistent with nn.Linear(in_dim, out_dim).
    # seq=256 so N=512 > tm=256 and the pipelined N-tiling path is exercised.
    batch, seq = 2, 256
    in_dim, out_dim = 32, 64
    rank = 4
    alpha = 2.0

    key = jax.random.PRNGKey(0)
    kx, kw, kb, ka, kB = jax.random.split(key, 5)

    x = jax.random.normal(kx, (batch, seq, in_dim), dtype=jnp.float32)
    weight = jax.random.normal(kw, (out_dim, in_dim), dtype=jnp.float32) * 0.1
    bias = jax.random.normal(kb, (out_dim,), dtype=jnp.float32) * 0.1

    std_dev = 1.0 / jnp.sqrt(jnp.float32(rank))
    A = jax.random.normal(ka, (in_dim, rank), dtype=jnp.float32) * std_dev
    # Module __init__ zeros B; use small deterministic random values instead so
    # the low-rank / DoRA path is actually exercised numerically.
    B = jax.random.normal(kB, (rank, out_dim), dtype=jnp.float32) * 0.05
    # m = ||linear.weight||_2 over dim 0, keepdim -> (1, in_dim)
    m = jnp.linalg.norm(weight, axis=0, keepdims=True)

    out = low_rank_layer_forward(x, weight, bias, A, B, m, alpha)
    out = jax.block_until_ready(out)

    # Pure-JAX reference (exact semantics of the PyTorch forward, use_dora=True)
    lora = A @ B
    numerator = weight + alpha * lora.T
    denominator = jnp.linalg.norm(numerator, axis=0, keepdims=True)
    new_weight = m * (numerator / denominator)
    expected = x.reshape(-1, in_dim) @ new_weight.T + bias
    expected = expected.reshape(batch, seq, out_dim)

    assert out.shape == (batch, seq, out_dim)
    assert jnp.allclose(out, expected, atol=1e-4, rtol=1e-4), (
        f"max abs err = {jnp.max(jnp.abs(out - expected))}"
    )
    print("KERNEL_OK")
</pallas_src>

<mosaic_0001>
module attributes {stable_mosaic.version = 11 : i64} {
  func.func @_dora_weight_kernel(%arg0: i32, %arg1: memref<1x1xf32, #tpu.memory_space<smem>>, %arg2: memref<64x32xf32, #tpu.memory_space<vmem>>, %arg3: memref<32x4xf32, #tpu.memory_space<vmem>>, %arg4: memref<4x64xf32, #tpu.memory_space<vmem>>, %arg5: memref<1x32xf32, #tpu.memory_space<vmem>>, %arg6: memref<64x32xf32, #tpu.memory_space<vmem>>) attributes {dimension_semantics = [#tpu.dimension_semantics<parallel>], iteration_bounds = array<i64: 1>, scalar_prefetch = 0 : i64, scratch_operands = 0 : i64, tpu.core_type = #tpu.core_type<tc>, window_params = [{transform_indices = @transform_0, window_bounds = array<i64: 1, 1>}, {transform_indices = @transform_1, window_bounds = array<i64: 64, 32>}, {transform_indices = @transform_2, window_bounds = array<i64: 32, 4>}, {pipeline_mode = #tpu.pipeline_mode<synchronous>, transform_indices = @transform_3, window_bounds = array<i64: 4, 64>}, {transform_indices = @transform_4, window_bounds = array<i64: 1, 32>}, {transform_indices = @transform_5, window_bounds = array<i64: 64, 32>}]} {
    %c0 = arith.constant 0 : index
    %c0_0 = arith.constant 0 : index
    %0 = memref.load %arg1[%c0, %c0_0] : memref<1x1xf32, #tpu.memory_space<smem>>
    %c0_1 = arith.constant 0 : index
    %c0_2 = arith.constant 0 : index
    %1 = vector.load %arg4[%c0_1, %c0_2] : memref<4x64xf32, #tpu.memory_space<vmem>>, vector<4x64xf32>
    %c0_3 = arith.constant 0 : index
    %c0_4 = arith.constant 0 : index
    %2 = vector.load %arg3[%c0_3, %c0_4] : memref<32x4xf32, #tpu.memory_space<vmem>>, vector<32x4xf32>
    %cst = arith.constant dense<0.000000e+00> : vector<64x32xf32>
    %3 = tpu.matmul %1, %2, %cst {dimension_numbers = #tpu.dot_dimension_numbers<[0], [1], [1], [0], [0, 1, 1, 0], [], []>} : vector<4x64xf32>, vector<32x4xf32>, vector<64x32xf32> -> vector<64x32xf32>
    %c0_5 = arith.constant 0 : index
    %c0_6 = arith.constant 0 : index
    %4 = vector.load %arg2[%c0_5, %c0_6] : memref<64x32xf32, #tpu.memory_space<vmem>>, vector<64x32xf32>
    %5 = vector.broadcast %0 : f32 to vector<64x32xf32>
    %6 = arith.mulf %5, %3 : vector<64x32xf32>
    %7 = arith.addf %4, %6 : vector<64x32xf32>
    %cst_7 = arith.constant 1.000000e+00 : f32
    %8 = vector.broadcast %cst_7 : f32 to vector<1x64xf32>
    %9 = arith.mulf %7, %7 : vector<64x32xf32>
    %cst_8 = arith.constant dense<0.000000e+00> : vector<1x32xf32>
    %10 = tpu.matmul %8, %9, %cst_8 {dimension_numbers = #tpu.dot_dimension_numbers<[1], [0], [0], [1], [0, 0, 1, 1], [], []>} : vector<1x64xf32>, vector<64x32xf32>, vector<1x32xf32> -> vector<1x32xf32>
    %11 = math.rsqrt %10 : vector<1x32xf32>
    %c0_9 = arith.constant 0 : index
    %c0_10 = arith.constant 0 : index
    %12 = vector.load %arg5[%c0_9, %c0_10] : memref<1x32xf32, #tpu.memory_space<vmem>>, vector<1x32xf32>
    %13 = arith.mulf %12, %11 : vector<1x32xf32>
    %14 = vector.broadcast %13 : vector<1x32xf32> to vector<64x32xf32>
    %15 = arith.mulf %7, %14 : vector<64x32xf32>
    %c0_11 = arith.constant 0 : index
    %c0_12 = arith.constant 0 : index
    %16 = vector.load %arg6[%c0_11, %c0_12] : memref<64x32xf32, #tpu.memory_space<vmem>>, vector<64x32xf32>
    tpu.vector_store %arg6[%c0_11, %c0_12], %15 {strides = array<i32>} : memref<64x32xf32, #tpu.memory_space<vmem>>, vector<64x32xf32>,
    return
  }
  func.func @transform_0(%arg0: i32) -> (i32, i32) {
    %c0_i32 = arith.constant 0 : i32
    %c0_i32_0 = arith.constant 0 : i32
    %c0_i32_1 = arith.constant 0 : i32
    return %c0_i32, %c0_i32_0 : i32, i32
  }
  func.func @transform_1(%arg0: i32) -> (i32, i32) {
    %c0_i32 = arith.constant 0 : i32
    %c0_i32_0 = arith.constant 0 : i32
    return %c0_i32, %arg0 : i32, i32
  }
  func.func @transform_2(%arg0: i32) -> (i32, i32) {
    %c0_i32 = arith.constant 0 : i32
    %c0_i32_0 = arith.constant 0 : i32
    return %arg0, %c0_i32 : i32, i32
  }
  func.func @transform_3(%arg0: i32) -> (i32, i32) {
    %c0_i32 = arith.constant 0 : i32
    %c0_i32_0 = arith.constant 0 : i32
    %c0_i32_1 = arith.constant 0 : i32
    return %c0_i32, %c0_i32_0 : i32, i32
  }
  func.func @transform_4(%arg0: i32) -> (i32, i32) {
    %c0_i32 = arith.constant 0 : i32
    %c0_i32_0 = arith.constant 0 : i32
    return %c0_i32, %arg0 : i32, i32
  }
  func.func @transform_5(%arg0: i32) -> (i32, i32) {
    %c0_i32 = arith.constant 0 : i32
    %c0_i32_0 = arith.constant 0 : i32
    return %c0_i32, %arg0 : i32, i32
  }
}

</mosaic_0001>

<llo_original>
// kernel: tpu_custom_call.1
$region0: #{tpu_custom_call.1}
  #allocation0 [shape = 'u32[]', space=smem, size = 0x4, offset = 0x4, fixed_abs, tag = 'smem constant byte address 0x4 - core index']
  #allocation1 [shape = 'u32[72,128]{1,0:T(1,128)}', space=vmem, size = 0x9000, scoped, tag = 'internal scratch']
  #allocation2 [shape = 'f32[1,1]{1,0:T(1,128)S(6)}', space=smem, size = 0x200, scoped, tag = 'scoped memory for tpu_custom_call.1']
  %s0 = inlined_call_operand.<no memory space> [shape: f32[1,1], index: 0, kind: input, shape index: {}]
  %s1 = inlined_call_operand.vmem [shape: f32[64,32], index: 1, kind: input, shape index: {}]
  %s2 = inlined_call_operand.vmem [shape: f32[32,4], index: 2, kind: input, shape index: {}]
  %s3 = inlined_call_operand.vmem [shape: f32[4,64], index: 3, kind: input, shape index: {}]
  %s4 = inlined_call_operand.vmem [shape: f32[1,32], index: 4, kind: input, shape index: {}]
  %s5 = inlined_call_operand.vmem [shape: f32[64,32], index: 5, kind: output, shape index: {}]
  %s6 = sld [smem:[#allocation0]]
  $region30: #{tpu_custom_call.1} parent=0
    _
  %s8 = ssub.s32 1, %s6
  %s9 = scalar_select 0, %s8, %s6
  %10 = sst [smem:[#allocation2]] %s0
  // Predicated region
  $region2: #{tpu_custom_call.1} parent=0 // pred_check
    _
  $region3: #{tpu_custom_call.1} parent=0 // pred_check_branch
    %12 = sbr.rel (0) target = $region5
  $region4: #{tpu_custom_call.1} parent=0 // pred_region
    _
  $region5: #{tpu_custom_call.1} parent=0 // pred_fallthru
    _
  // Predicated region
  $region6: #{tpu_custom_call.1} parent=0 // pred_check
    _
  $region7: #{tpu_custom_call.1} parent=0 // pred_check_branch
    %14 = sbr.rel (0) target = $region9
  $region8: #{tpu_custom_call.1} parent=0 // pred_region
    _
  $region9: #{tpu_custom_call.1} parent=0 // pred_fallthru
    _
  // Predicated region
  $region10: #{tpu_custom_call.1} parent=0 // pred_check
    _
  $region11: #{tpu_custom_call.1} parent=0 // pred_check_branch
    %16 = sbr.rel (0) target = $region13
  $region12: #{tpu_custom_call.1} parent=0 // pred_region
    _
  $region13: #{tpu_custom_call.1} parent=0 // pred_fallthru
    _
  // Predicated region
  $region14: #{tpu_custom_call.1} parent=0 // pred_check
    _
  $region15: #{tpu_custom_call.1} parent=0 // pred_check_branch
    %18 = sbr.rel (0) target = $region17
  $region16: #{tpu_custom_call.1} parent=0 // pred_region
    _
  $region17: #{tpu_custom_call.1} parent=0 // pred_fallthru
    _
  // Predicated region
  $region18: #{tpu_custom_call.1} parent=0 // pred_check
    _
  $region19: #{tpu_custom_call.1} parent=0 // pred_check_branch
    %20 = sbr.rel (0) target = $region21
  $region20: #{tpu_custom_call.1} parent=0 // pred_region
    _
  $region21: #{tpu_custom_call.1} parent=0 // pred_fallthru
    _
  %s21 = sld [smem:[#allocation2]]
  %v22 = vld [vmem:[%s3] sm:$0xf]
  %v23 = vld [vmem:[%s2] sm:$0xff]
  %v24 = vld [vmem:[%s2 + $0x8] sm:$0xff]
  %v25 = vld [vmem:[%s2 + $0x10] sm:$0xff]
  %v26 = vld [vmem:[%s2 + $0x18] sm:$0xff]
  %27 = vxpose.xlu0.b32.start [1/16] %v22, 128
  %28 = vxpose.xlu0.b32.cont [2/16] 0.0, 128
  %29 = vxpose.xlu0.b32.cont [3/16] 0.0, 128
  %30 = vxpose.xlu0.b32.cont [4/16] 0.0, 128
  %31 = vxpose.xlu0.b32.cont [5/16] 0.0, 128
  %32 = vxpose.xlu0.b32.cont [6/16] 0.0, 128
  %33 = vxpose.xlu0.b32.cont [7/16] 0.0, 128
  %34 = vxpose.xlu0.b32.cont [8/16] 0.0, 128
  %35 = vxpose.xlu0.b32.cont [9/16] 0.0, 128
  %36 = vxpose.xlu0.b32.cont [10/16] 0.0, 128
  %37 = vxpose.xlu0.b32.cont [11/16] 0.0, 128
  %38 = vxpose.xlu0.b32.cont [12/16] 0.0, 128
  %39 = vxpose.xlu0.b32.cont [13/16] 0.0, 128
  %40 = vxpose.xlu0.b32.cont [14/16] 0.0, 128
  %41 = vxpose.xlu0.b32.cont [15/16] 0.0, 128
  %42 = vxpose.xlu0.b32.end [16/16] 0.0, 128
  %v43 = vpop.trf.xlu0
  %v44 = vpop.trf.xlu0
  %v45 = vpop.trf.xlu0
  %v46 = vpop.trf.xlu0
  %v47 = vpop.trf.xlu0
  %v48 = vpop.trf.xlu0
  %v49 = vpop.trf.xlu0
  %v50 = vpop.trf.xlu0
  %v51 = vpop.trf.xlu0
  %v52 = vpop.trf.xlu0
  %v53 = vpop.trf.xlu0
  %v54 = vpop.trf.xlu0
  %v55 = vpop.trf.xlu0
  %v56 = vpop.trf.xlu0
  %v57 = vpop.trf.xlu0
  %v58 = vpop.trf.xlu0
  %vm59 = vcmask 31744
  %v61 = vsel %vm59, %v43, 0
  %v64 = vsel %vm59, %v44, 0
  %v67 = vsel %vm59, %v45, 0
  %v70 = vsel %vm59, %v46, 0
  %v73 = vsel %vm59, %v47, 0
  %v76 = vsel %vm59, %v48, 0
  %v79 = vsel %vm59, %v49, 0
  %v82 = vsel %vm59, %v50, 0
  %v85 = vsel %vm59, %v23, 0
  %v88 = vsel %vm59, %v24, 0
  %v91 = vsel %vm59, %v25, 0
  %v94 = vsel %vm59, %v26, 0
  %96 = vmatpush.xpose.msra.mxu0 0.0
  %97 = vmatpush.xpose.msra.mxu0 0.0
  %98 = vmatpush.xpose.msra.mxu0 0.0
  %99 = vmatpush.xpose.msra.mxu0 0.0
  %100 = vmatpush.xpose.msra.mxu0 0.0
  %101 = vmatpush.xpose.msra.mxu0 0.0
  %102 = vmatpush.xpose.msra.mxu0 0.0
  %103 = vmatpush.xpose.msra.mxu0 0.0
  %104 = vmatpush.xpose.msra.mxu0 0.0
  %105 = vmatpush.xpose.msra.mxu0 0.0
  %106 = vmatpush.xpose.msra.mxu0 0.0
  %107 = vmatpush.xpose.msra.mxu0 0.0
  %108 = vmatpush.xpose.msra.mxu0 %v94
  %109 = vmatpush.xpose.msra.mxu0 %v91
  %110 = vmatpush.xpose.msra.mxu0 %v88
  %111 = vmatpush.xpose.msra.mxu0 %v85
  %112 = vmatmul.f32.gmra.mxu0 %v61
  %v113 = vpop.f32.mrf.mxu0
  %v114 = vadd.f32 0.0, %v113
  %115 = vmatmul.f32.gmra.mxu0 %v64
  %v116 = vpop.f32.mrf.mxu0
  %v117 = vadd.f32 0.0, %v116
  %118 = vmatmul.f32.gmra.mxu0 %v67
  %v119 = vpop.f32.mrf.mxu0
  %v120 = vadd.f32 0.0, %v119
  %121 = vmatmul.f32.gmra.mxu0 %v70
  %v122 = vpop.f32.mrf.mxu0
  %v123 = vadd.f32 0.0, %v122
  %124 = vmatmul.f32.gmra.mxu0 %v73
  %v125 = vpop.f32.mrf.mxu0
  %v126 = vadd.f32 0.0, %v125
  %127 = vmatmul.f32.gmra.mxu0 %v76
  %v128 = vpop.f32.mrf.mxu0
  %v129 = vadd.f32 0.0, %v128
  %130 = vmatmul.f32.gmra.mxu0 %v79
  %v131 = vpop.f32.mrf.mxu0
  %v132 = vadd.f32 0.0, %v131
  %133 = vmatmul.f32.gmra.mxu0 %v82
  %v134 = vpop.f32.mrf.mxu0
  %v135 = vadd.f32 0.0, %v134
  %136 = vdwg.mxu0
  %v137 = vld [vmem:[%s1] sm:$0xff]
  %v138 = vld [vmem:[%s1 + $0x8] sm:$0xff]
  %v139 = vld [vmem:[%s1 + $0x10] sm:$0xff]
  %v140 = vld [vmem:[%s1 + $0x18] sm:$0xff]
  %v141 = vld [vmem:[%s1 + $0x20] sm:$0xff]
  %v142 = vld [vmem:[%s1 + $0x28] sm:$0xff]
  %v143 = vld [vmem:[%s1 + $0x30] sm:$0xff]
  %v144 = vld [vmem:[%s1 + $0x38] sm:$0xff]
  %v145 = vstv %s21
  %v146 = vmul.f32 %v145, %v114
  %v147 = vmul.f32 %v145, %v117
  %v148 = vmul.f32 %v145, %v120
  %v149 = vmul.f32 %v145, %v123
  %v150 = vmul.f32 %v145, %v126
  %v151 = vmul.f32 %v145, %v129
  %v152 = vmul.f32 %v145, %v132
  %v153 = vmul.f32 %v145, %v135
  %v154 = vadd.f32 %v137, %v146
  %v155 = vadd.f32 %v138, %v147
  %v156 = vadd.f32 %v139, %v148
  %v157 = vadd.f32 %v140, %v149
  %v158 = vadd.f32 %v141, %v150
  %v159 = vadd.f32 %v142, %v151
  %v160 = vadd.f32 %v143, %v152
  %v161 = vadd.f32 %v144, %v153
  %v162 = vmul.f32 %v154, %v154
  %v163 = vmul.f32 %v155, %v155
  %v164 = vmul.f32 %v156, %v156
  %v165 = vmul.f32 %v157, %v157
  %v166 = vmul.f32 %v158, %v158
  %v167 = vmul.f32 %v159, %v159
  %v168 = vmul.f32 %v160, %v160
  %v169 = vmul.f32 %v161, %v161
  %vm170 = vcmask 523264
  %v172 = vsel %vm170, 1.0, 0
  %174 = vmatpush.msra.mxu0 0.0
  %175 = vmatpush.msra.mxu0 0.0
  %176 = vmatpush.msra.mxu0 0.0
  %177 = vmatpush.msra.mxu0 0.0
  %178 = vmatpush.msra.mxu0 0.0
  %179 = vmatpush.msra.mxu0 0.0
  %180 = vmatpush.msra.mxu0 0.0
  %181 = vmatpush.msra.mxu0 0.0
  %182 = vmatpush.msra.mxu0 %v169
  %183 = vmatpush.msra.mxu0 %v168
  %184 = vmatpush.msra.mxu0 %v167
  %185 = vmatpush.msra.mxu0 %v166
  %186 = vmatpush.msra.mxu0 %v165
  %187 = vmatpush.msra.mxu0 %v164
  %188 = vmatpush.msra.mxu0 %v163
  %189 = vmatpush.msra.mxu0 %v162
  %190 = vmatmul.f32.gmra.mxu0 %v172
  %v191 = vpop.f32.mrf.mxu0
  %v192 = vadd.f32 0.0, %v191
  %193 = vdwg.mxu0
  %v194 = vrsqrt.pop %v192
  %v195 = vmul.f32 %v194, %v192
  %v196 = vmul.f32 %v195, %v194
  %v197 = vmul.f32 0.5, %v196
  %v198 = vsub.f32 1.5, %v197
  %v199 = vmul.f32 %v194, %v198
  %vm200 = vweird.f32 %v192
  %vm201 = vweird.f32 %v194
  %vm202 = vmor %vm200, %vm201
  %v203 = vsel %vm202, %v194, %v199
  %v204 = vld [vmem:[%s4] sm:$0x1]
  %v205 = vmul.f32 %v204, %v203
  %v207 = vperm.slane %v205, 0
  %v209 = vmul.f32 %v154, %v207
  %v210 = vmul.f32 %v155, %v207
  %v211 = vmul.f32 %v156, %v207
  %v212 = vmul.f32 %v157, %v207
  %v213 = vmul.f32 %v158, %v207
  %v214 = vmul.f32 %v159, %v207
  %v215 = vmul.f32 %v160, %v207
  %v216 = vmul.f32 %v161, %v207
  %vm217 = vcmask 261120
  %218 = vst.msk [vmem:[%s5] sm:$0xff] %vm217, %v209
  %219 = vst.msk [vmem:[%s5 + $0x8] sm:$0xff] %vm217, %v210
  %220 = vst.msk [vmem:[%s5 + $0x10] sm:$0xff] %vm217, %v211
  %221 = vst.msk [vmem:[%s5 + $0x18] sm:$0xff] %vm217, %v212
  %222 = vst.msk [vmem:[%s5 + $0x20] sm:$0xff] %vm217, %v213
  %223 = vst.msk [vmem:[%s5 + $0x28] sm:$0xff] %vm217, %v214
  %224 = vst.msk [vmem:[%s5 + $0x30] sm:$0xff] %vm217, %v215
  %225 = vst.msk [vmem:[%s5 + $0x38] sm:$0xff] %vm217, %v216
  // Predicated region
  $region22: #{tpu_custom_call.1} parent=0 // pred_check
    _
  $region23: #{tpu_custom_call.1} parent=0 // pred_check_branch
    %227 = sbr.rel (0) target = $region25
  $region24: #{tpu_custom_call.1} parent=0 // pred_region
    _
  $region25: #{tpu_custom_call.1} parent=0 // pred_fallthru
    _
  // Predicated region
  $region26: #{tpu_custom_call.1} parent=0 // pred_check
    _
  $region27: #{tpu_custom_call.1} parent=0 // pred_check_branch
    %229 = sbr.rel (0) target = $region29
  $region28: #{tpu_custom_call.1} parent=0 // pred_region
    _
  $region29: #{tpu_custom_call.1} parent=0 // pred_fallthru
    _

</llo_original>
